<compile_context>
chip_gen: v7x
topology: tpu7x:2x2x1
jax: 0.10.0
libtpu: 0.0.40
codegen_flags: <defaults>
</compile_context>

<pallas_src>
import functools
import math

import jax
import jax.numpy as jnp
from jax import lax
from jax.experimental import pallas as pl
from jax.experimental.pallas import tpu as pltpu


# --------------------------------------------------------------------------- #
# Kernels
# --------------------------------------------------------------------------- #
def _linear_kernel(x_ref, w_ref, b_ref, o_ref):
    """o = x @ w + b with f32 MXU accumulation."""
    acc = jnp.dot(x_ref[...], w_ref[...], preferred_element_type=jnp.float32)
    o_ref[...] = (acc + b_ref[...]).astype(o_ref.dtype)


def _flash_attn_kernel(q_ref, k_ref, v_ref, o_ref, m_ref, l_ref, acc_ref):
    """Online-softmax attention for one (batch, head, q-tile); kv-tile axis is
    the innermost ("arbitrary") grid axis.  Q is pre-scaled by 1/sqrt(Dh)."""
    ki = pl.program_id(3)

    @pl.when(ki == 0)
    def _init():
        m_ref[...] = jnp.full(m_ref.shape, -jnp.inf, jnp.float32)
        l_ref[...] = jnp.zeros(l_ref.shape, jnp.float32)
        acc_ref[...] = jnp.zeros(acc_ref.shape, jnp.float32)

    q = q_ref[...]                      # (tq, Dh) compute dtype
    k = k_ref[...]                      # (tk, Dh)
    v = v_ref[...]                      # (tk, Dh)

    # Contract on the Dh axis directly — no materialized K transpose.
    s = lax.dot_general(q, k, (((1,), (1,)), ((), ())),
                        preferred_element_type=jnp.float32)          # (tq, tk)

    m_prev = m_ref[...]
    m_new = jnp.maximum(m_prev, jnp.max(s, axis=-1, keepdims=True))  # (tq, 1)
    alpha = jnp.exp(m_prev - m_new)                                   # (tq, 1)
    p = jnp.exp(s - m_new)                                            # f32 softmax math

    l_ref[...] = alpha * l_ref[...] + jnp.sum(p, axis=-1, keepdims=True)
    acc_ref[...] = alpha * acc_ref[...] + jnp.dot(
        p.astype(v.dtype), v, preferred_element_type=jnp.float32)
    m_ref[...] = m_new

    @pl.when(ki == pl.num_programs(3) - 1)
    def _finalize():
        l = l_ref[...]
        inv_l = pl.reciprocal(l, approx=True)        # EUP slot (cheap)
        inv_l = inv_l * (2.0 - l * inv_l)            # one Newton step -> ~f32 exact
        o_ref[...] = (acc_ref[...] * inv_l).astype(o_ref.dtype)


# --------------------------------------------------------------------------- #
# Wrapper helpers
# --------------------------------------------------------------------------- #
def _divisor_tile(dim, target):
    """Largest multiple-of-8 divisor of `dim` <= target; else the full dim."""
    if dim <= target or dim % 8 != 0:
        return dim
    best = 8
    for t in range(16, target + 1, 8):
        if dim % t == 0:
            best = t
    return best


def _const_spec(block_shape, index_map):
    """BlockSpec for constant-index weights: single pipeline buffer (no dead
    double-buffer).  Falls back if this jax version lacks pipeline_mode."""
    try:
        return pl.BlockSpec(block_shape, index_map, pipeline_mode=pl.Buffered(1))
    except (TypeError, AttributeError):
        return pl.BlockSpec(block_shape, index_map)


def _vmem_limit_bytes():
    """Generation-aware scoped-VMEM limit with ~16 MiB headroom."""
    try:
        cap = pltpu.get_tpu_info().vmem_capacity_bytes
    except Exception:
        cap = 64 * 1024 * 1024  # conservative fallback (v7x physical per TC)
    return int(max(32 * 1024 * 1024, min(cap - 16 * 1024 * 1024, 112 * 1024 * 1024)))


def _linear(x, w, b, out_dtype, vmem_limit):
    M, K = x.shape
    N = w.shape[1]
    tm = _divisor_tile(M, 256)
    return pl.pallas_call(
        _linear_kernel,
        out_shape=jax.ShapeDtypeStruct((M, N), out_dtype),
        grid=(M // tm,),
        in_specs=[
            pl.BlockSpec((tm, K), lambda i: (i, 0)),
            _const_spec((K, N), lambda i: (0, 0)),
            _const_spec((1, N), lambda i: (0, 0)),
        ],
        out_specs=pl.BlockSpec((tm, N), lambda i: (i, 0)),
        compiler_params=pltpu.CompilerParams(
            dimension_semantics=("parallel",),
            vmem_limit_bytes=vmem_limit),
    )(x, w, b)


def _flash_attention(q, k, v, out_dtype, vmem_limit):
    B, H, S, Dh = q.shape
    # v7x-safe tile caps (64 MiB VMEM): tq <= 256, tk <= 512; long sequences
    # stream along the "arbitrary" kv axis so VMEM stays O(tq * tk).
    tq = _divisor_tile(S, 256)
    tk = _divisor_tile(S, 512)
    grid = (B, H, S // tq, S // tk)
    return pl.pallas_call(
        _flash_attn_kernel,
        out_shape=jax.ShapeDtypeStruct((B, H, S, Dh), out_dtype),
        grid=grid,
        in_specs=[
            pl.BlockSpec((None, None, tq, Dh), lambda b, h, qi, ki: (b, h, qi, 0)),
            pl.BlockSpec((None, None, tk, Dh), lambda b, h, qi, ki: (b, h, ki, 0)),
            pl.BlockSpec((None, None, tk, Dh), lambda b, h, qi, ki: (b, h, ki, 0)),
        ],
        out_specs=pl.BlockSpec((None, None, tq, Dh),
                               lambda b, h, qi, ki: (b, h, qi, 0)),
        scratch_shapes=[
            pltpu.VMEM((tq, 1), jnp.float32),    # running max
            pltpu.VMEM((tq, 1), jnp.float32),    # running denominator
            pltpu.VMEM((tq, Dh), jnp.float32),   # running context accumulator
        ],
        compiler_params=pltpu.CompilerParams(
            dimension_semantics=("parallel", "parallel", "parallel", "arbitrary"),
            vmem_limit_bytes=vmem_limit),
    )(q, k, v)


# --------------------------------------------------------------------------- #
# Public entry point
# --------------------------------------------------------------------------- #
def multi_head_attention_pallas(x, params, heads, *, compute_dtype=None):
    """x: (B, S, E); params: PyTorch-convention weights (out, in) / biases."""
    B, S, E = x.shape
    assert E % heads == 0
    Dh = E // heads
    scale = 1.0 / math.sqrt(Dh)
    dtype = jnp.dtype(compute_dtype) if compute_dtype is not None else x.dtype
    vmem_limit = _vmem_limit_bytes()

    # PyTorch Linear stores (out, in): pre-transpose to (in, out) and fold the
    # 1/sqrt(Dh) attention scale into the Q projection (weights + bias).
    wqkv = jnp.concatenate(
        [params["wq"].T * scale, params["wk"].T, params["wv"].T],
        axis=1).astype(dtype)                                        # (E, 3E)
    bqkv = jnp.concatenate(
        [params["bq"] * scale, params["bk"], params["bv"]]
    ).reshape(1, 3 * E).astype(jnp.float32)
    wt = params["wt"].T.astype(dtype)                                # (E, E)
    bt = params["bt"].reshape(1, E).astype(jnp.float32)

    # Stage 1: fused, batch-amortized QKV projection over (B*S, E) rows.
    xf = x.reshape(B * S, E).astype(dtype)
    qkv = _linear(xf, wqkv, bqkv, dtype, vmem_limit)                 # (B*S, 3E)

    # Layout plumbing (XLA): (B*S, 3E) -> 3 x (B, H, S, Dh); the head axis
    # becomes a grid axis so no lane-unaligned per-head slicing in-kernel.
    qkv = qkv.reshape(B, S, 3, heads, Dh).transpose(2, 0, 3, 1, 4)
    q, k, v = qkv[0], qkv[1], qkv[2]

    # Stage 2: online-softmax (flash) attention.
    ctx = _flash_attention(q, k, v, dtype, vmem_limit)               # (B, H, S, Dh)

    # Stage 3: single K=E output projection over (B*S, E) rows.
    ctx = ctx.transpose(0, 2, 1, 3).reshape(B * S, E)
    out = _linear(ctx, wt, bt, x.dtype, vmem_limit)                  # (B*S, E)
    return out.reshape(B, S, E)


# --------------------------------------------------------------------------- #
# Pure-JAX reference (mirrors the PyTorch forward exactly)
# --------------------------------------------------------------------------- #
def multi_head_attention_ref(x, params, heads):
    B, S, E = x.shape
    Dh = E // heads
    K = x @ params["wk"].T + params["bk"]
    Q = x @ params["wq"].T + params["bq"]
    V = x @ params["wv"].T + params["bv"]
    K = K.reshape(B, S, heads, Dh).transpose(0, 2, 1, 3)
    Q = Q.reshape(B, S, heads, Dh).transpose(0, 2, 1, 3)
    V = V.reshape(B, S, heads, Dh).transpose(0, 2, 1, 3)
    A = jnp.einsum("bhqd,bhkd->bhqk", Q, K) / (Dh ** 0.5)
    A = jax.nn.softmax(A, axis=-1)
    ctx = jnp.einsum("bhqk,bhkd->bhqd", A, V)
    ctx = ctx.transpose(0, 2, 1, 3).reshape(B, S, E)
    return ctx @ params["wt"].T + params["bt"]


if __name__ == "__main__":
    # Small shapes consistent with the module's forward.
    B, S, E, H = 2, 8, 32, 4

    key = jax.random.PRNGKey(0)
    keys = jax.random.split(key, 9)
    init_scale = 1.0 / math.sqrt(E)
    params = {
        "wq": jax.random.uniform(keys[0], (E, E), jnp.float32, -init_scale, init_scale),
        "bq": jax.random.uniform(keys[1], (E,), jnp.float32, -init_scale, init_scale),
        "wk": jax.random.uniform(keys[2], (E, E), jnp.float32, -init_scale, init_scale),
        "bk": jax.random.uniform(keys[3], (E,), jnp.float32, -init_scale, init_scale),
        "wv": jax.random.uniform(keys[4], (E, E), jnp.float32, -init_scale, init_scale),
        "bv": jax.random.uniform(keys[5], (E,), jnp.float32, -init_scale, init_scale),
        "wt": jax.random.uniform(keys[6], (E, E), jnp.float32, -init_scale, init_scale),
        "bt": jax.random.uniform(keys[7], (E,), jnp.float32, -init_scale, init_scale),
    }
    x = jax.random.normal(keys[8], (B, S, E), jnp.float32)

    ref = multi_head_attention_ref(x, params, H)

    # f32 path — tight check against the reference.
    out = multi_head_attention_pallas(x, params, H)
    out = jax.block_until_ready(out)
    assert out.shape == (B, S, E)
    assert jnp.allclose(out, ref, atol=1e-3, rtol=1e-3), "f32 mismatch vs reference"

    # bf16 MXU-operand path (f32 accumulation / f32 softmax) — loose check.
    out_bf16 = multi_head_attention_pallas(x, params, H,
                                           compute_dtype=jnp.bfloat16)
    out_bf16 = jax.block_until_ready(out_bf16)
    assert jnp.allclose(out_bf16, ref, atol=5e-2, rtol=5e-2), "bf16 mismatch vs reference"

    print("KERNEL_OK")
</pallas_src>

<mosaic_0001>
module attributes {stable_mosaic.version = 11 : i64} {
  func.func @_linear_kernel(%arg0: i32, %arg1: memref<16x32xf32, #tpu.memory_space<vmem>>, %arg2: memref<32x96xf32, #tpu.memory_space<vmem>>, %arg3: memref<1x96xf32, #tpu.memory_space<vmem>>, %arg4: memref<16x96xf32, #tpu.memory_space<vmem>>) attributes {dimension_semantics = [#tpu.dimension_semantics<parallel>], iteration_bounds = array<i64: 1>, scalar_prefetch = 0 : i64, scratch_operands = 0 : i64, tpu.core_type = #tpu.core_type<tc>, window_params = [{transform_indices = @transform_0, window_bounds = array<i64: 16, 32>}, {pipeline_mode = #tpu.pipeline_mode<synchronous>, transform_indices = @transform_1, window_bounds = array<i64: 32, 96>}, {pipeline_mode = #tpu.pipeline_mode<synchronous>, transform_indices = @transform_2, window_bounds = array<i64: 1, 96>}, {transform_indices = @transform_3, window_bounds = array<i64: 16, 96>}]} {
    %c0 = arith.constant 0 : index
    %c0_0 = arith.constant 0 : index
    %0 = vector.load %arg1[%c0, %c0_0] : memref<16x32xf32, #tpu.memory_space<vmem>>, vector<16x32xf32>
    %c0_1 = arith.constant 0 : index
    %c0_2 = arith.constant 0 : index
    %1 = vector.load %arg2[%c0_1, %c0_2] : memref<32x96xf32, #tpu.memory_space<vmem>>, vector<32x96xf32>
    %cst = arith.constant dense<0.000000e+00> : vector<16x96xf32>
    %2 = tpu.matmul %0, %1, %cst {dimension_numbers = #tpu.dot_dimension_numbers<[1], [0], [0], [1], [0, 0, 1, 1], [], []>} : vector<16x32xf32>, vector<32x96xf32>, vector<16x96xf32> -> vector<16x96xf32>
    %c0_3 = arith.constant 0 : index
    %c0_4 = arith.constant 0 : index
    %3 = vector.load %arg3[%c0_3, %c0_4] : memref<1x96xf32, #tpu.memory_space<vmem>>, vector<1x96xf32>
    %4 = vector.broadcast %3 : vector<1x96xf32> to vector<16x96xf32>
    %5 = arith.addf %2, %4 : vector<16x96xf32>
    %c0_5 = arith.constant 0 : index
    %c0_6 = arith.constant 0 : index
    %6 = vector.load %arg4[%c0_5, %c0_6] : memref<16x96xf32, #tpu.memory_space<vmem>>, vector<16x96xf32>
    tpu.vector_store %arg4[%c0_5, %c0_6], %5 {strides = array<i32>} : memref<16x96xf32, #tpu.memory_space<vmem>>, vector<16x96xf32>,
    return
  }
  func.func @transform_0(%arg0: i32) -> (i32, i32) {
    %c0_i32 = arith.constant 0 : i32
    %c0_i32_0 = arith.constant 0 : i32
    return %arg0, %c0_i32 : i32, i32
  }
  func.func @transform_1(%arg0: i32) -> (i32, i32) {
    %c0_i32 = arith.constant 0 : i32
    %c0_i32_0 = arith.constant 0 : i32
    %c0_i32_1 = arith.constant 0 : i32
    return %c0_i32, %c0_i32_0 : i32, i32
  }
  func.func @transform_2(%arg0: i32) -> (i32, i32) {
    %c0_i32 = arith.constant 0 : i32
    %c0_i32_0 = arith.constant 0 : i32
    %c0_i32_1 = arith.constant 0 : i32
    return %c0_i32, %c0_i32_0 : i32, i32
  }
  func.func @transform_3(%arg0: i32) -> (i32, i32) {
    %c0_i32 = arith.constant 0 : i32
    %c0_i32_0 = arith.constant 0 : i32
    return %arg0, %c0_i32 : i32, i32
  }
}

</mosaic_0001>

<llo_original>
// kernel: tpu_custom_call.1
$region0: #{tpu_custom_call.1}
  #allocation0 [shape = 'u32[]', space=smem, size = 0x4, offset = 0x4, fixed_abs, tag = 'smem constant byte address 0x4 - core index']
  #allocation1 [shape = 'u32[144,128]{1,0:T(1,128)}', space=vmem, size = 0x12000, scoped, tag = 'internal scratch']
  %s0 = inlined_call_operand.hbm [shape: f32[16,32], index: 0, kind: input, shape index: {}]
  %s1 = inlined_call_operand.hbm [shape: f32[32,96], index: 1, kind: input, shape index: {}]
  %s2 = inlined_call_operand.vmem [shape: f32[1,96], index: 2, kind: input, shape index: {}]
  %s3 = inlined_call_operand.hbm [shape: f32[16,96], index: 3, kind: output, shape index: {}]
  %s4 = sld [smem:[#allocation0]]
  $region30: #{tpu_custom_call.1} parent=0
    _
  %s6 = ssub.s32 1, %s4
  %s7 = scalar_select 0, %s6, %s4
  $region1: #{tpu_custom_call.1} parent=0
    #allocation2 [shape = 'u8[8192]{0}', space=vmem, size = 0x2000, scoped, tag = 'input window, operand 0, single buffered']
    #allocation3 [shape = 's32[1]{0}', space=sflag, size = 0x4, scoped, tag = 'scoped memory for tpu_custom_call.1']
    #allocation4 [shape = 's32[1]{0}', space=sflag, size = 0x4, scoped, tag = 'scoped memory for tpu_custom_call.1']
    #allocation5 [shape = 'u8[16384]{0}', space=vmem, size = 0x4000, scoped, tag = 'input window, operand 1, single buffered']
    #allocation6 [shape = 's32[1]{0}', space=sflag, size = 0x4, scoped, tag = 'scoped memory for tpu_custom_call.1']
    #allocation7 [shape = 'u8[8192]{0}', space=vmem, size = 0x2000, scoped, tag = 'output window, operand 0, single buffered']
    %8 = vsyncpa [#allocation3], 0
    %9 = vsyncpa [#allocation6], 0
    %10 = vsyncpa [#allocation4], 0
    // Predicated region
    $region2: #{tpu_custom_call.1} parent=1 // pred_check
      _
    $region3: #{tpu_custom_call.1} parent=1 // pred_check_branch
      %12 = sbr.rel (0) target = $region5
    $region4: #{tpu_custom_call.1} parent=1 // pred_region
      %s14 = ssub.s32 256, 256
      %15 = vsyncadd [#allocation3], %s14
      %s16 = sshll.u32 [#allocation2], 4
      %s17 = int_to_ptr.vmem [resolvable:$true] %s16
      %22 = dma.hbm_to_vmem [thread:$0]  %s0, 256, %s17, [#allocation3], 128, 128, 8
    $region5: #{tpu_custom_call.1} parent=1 // pred_fallthru
      _
    // Predicated region
    $region6: #{tpu_custom_call.1} parent=1 // pred_check
      _
    $region7: #{tpu_custom_call.1} parent=1 // pred_check_branch
      %24 = sbr.rel (0) target = $region9
    $region8: #{tpu_custom_call.1} parent=1 // pred_region
      %s26 = ssub.s32 512, 512
      %27 = vsyncadd [#allocation6], %s26
      %s28 = sshll.u32 [#allocation5], 4
      %s29 = int_to_ptr.vmem [resolvable:$true] %s28
      %34 = dma.hbm_to_vmem [thread:$0]  %s1, 512, %s29, [#allocation6], 128, 128, 8
    $region9: #{tpu_custom_call.1} parent=1 // pred_fallthru
      _
    // Predicated region
    $region10: #{tpu_custom_call.1} parent=1 // pred_check
      _
    $region11: #{tpu_custom_call.1} parent=1 // pred_check_branch
      %36 = sbr.rel (0) target = $region13
    $region12: #{tpu_custom_call.1} parent=1 // pred_region
      _
    $region13: #{tpu_custom_call.1} parent=1 // pred_fallthru
      _
    // Predicated region
    $region14: #{tpu_custom_call.1} parent=1 // pred_check
      _
    $region15: #{tpu_custom_call.1} parent=1 // pred_check_branch
      %38 = sbr.rel (0) target = $region17
    $region16: #{tpu_custom_call.1} parent=1 // pred_region
      %39 = dma.done [#allocation3], 256
    $region17: #{tpu_custom_call.1} parent=1 // pred_fallthru
      _
    // Predicated region
    $region18: #{tpu_custom_call.1} parent=1 // pred_check
      _
    $region19: #{tpu_custom_call.1} parent=1 // pred_check_branch
      %41 = sbr.rel (0) target = $region21
    $region20: #{tpu_custom_call.1} parent=1 // pred_region
      %42 = dma.done [#allocation6], 512
    $region21: #{tpu_custom_call.1} parent=1 // pred_fallthru
      _
    %v43 = vld [vmem:[#allocation2] sm:$0xff]
    %v44 = vld [vmem:[#allocation2 + $0x8] sm:$0xff]
    %v45 = vld [vmem:[#allocation5] sm:$0xff]
    %v46 = vld [vmem:[#allocation5 + $0x8] sm:$0xff]
    %v47 = vld [vmem:[#allocation5 + $0x10] sm:$0xff]
    %v48 = vld [vmem:[#allocation5 + $0x18] sm:$0xff]
    %v49 = vld [vmem:[%s2] sm:$0x1]
    %v51 = vlaneseq
    %v52 = vshrl.u32 %v51, 7
    %v53 = vsub.s32 0, %v52
    %v54 = vrot.slane %v49, %v53
    %vm56 = vcmask 261120
    %v58 = vsel %vm56, %v43, 0
    %v61 = vsel %vm56, %v44, 0
    %63 = vmatprep.subr.mxu0 0.0
    %64 = vmatpush1.msra.mxu0 %v45
    %65 = vmatprep.subr.mxu0 0.0
    %66 = vmatpush1.msra.mxu0 %v46
    %67 = vmatprep.subr.mxu0 0.0
    %68 = vmatpush1.msra.mxu0 %v47
    %69 = vmatprep.subr.mxu0 0.0
    %70 = vmatpush1.msra.mxu0 %v48
    %71 = vmatprep.subr.mxu0 0.0
    %72 = vmatpush1.msra.mxu0 0.0
    %73 = vmatprep.subr.mxu0 0.0
    %74 = vmatpush1.msra.mxu0 0.0
    %75 = vmatprep.subr.mxu0 0.0
    %76 = vmatpush1.msra.mxu0 0.0
    %77 = vmatprep.subr.mxu0 0.0
    %78 = vmatpush1.msra.mxu0 0.0
    %79 = vmatprep.subr.mxu0 0.0
    %80 = vmatpush1.msra.mxu0 0.0
    %81 = vmatprep.subr.mxu0 0.0
    %82 = vmatpush1.msra.mxu0 0.0
    %83 = vmatprep.subr.mxu0 0.0
    %84 = vmatpush1.msra.mxu0 0.0
    %85 = vmatprep.subr.mxu0 0.0
    %86 = vmatpush1.msra.mxu0 0.0
    %87 = vmatprep.subr.mxu0 0.0
    %88 = vmatpush1.msra.mxu0 0.0
    %89 = vmatprep.subr.mxu0 0.0
    %90 = vmatpush1.msra.mxu0 0.0
    %91 = vmatprep.subr.mxu0 0.0
    %92 = vmatpush1.msra.mxu0 0.0
    %93 = vmatprep.subr.mxu0 0.0
    %94 = vmatpush1.msra.mxu0 0.0
    %95 = vmatprep.subr.mxu0 0.0
    %96 = vmatpush1.msra.mxu0 0.0
    %97 = vmatprep.subr.mxu0 0.0
    %98 = vmatpush1.msra.mxu0 0.0
    %99 = vmatprep.subr.mxu0 0.0
    %100 = vmatpush1.msra.mxu0 0.0
    %101 = vmatprep.subr.mxu0 0.0
    %102 = vmatpush1.msra.mxu0 0.0
    %103 = vmatprep.subr.mxu0 0.0
    %104 = vmatpush1.msra.mxu0 0.0
    %105 = vmatprep.subr.mxu0 0.0
    %106 = vmatpush1.msra.mxu0 0.0
    %107 = vmatprep.subr.mxu0 0.0
    %108 = vmatpush1.msra.mxu0 0.0
    %109 = vmatprep.subr.mxu0 0.0
    %110 = vmatpush1.msra.mxu0 0.0
    %111 = vmatprep.subr.mxu0 0.0
    %112 = vmatpush1.msra.mxu0 0.0
    %113 = vmatprep.subr.mxu0 0.0
    %114 = vmatpush1.msra.mxu0 0.0
    %115 = vmatprep.subr.mxu0 0.0
    %116 = vmatpush1.msra.mxu0 0.0
    %117 = vmatprep.subr.mxu0 0.0
    %118 = vmatpush1.msra.mxu0 0.0
    %119 = vmatprep.subr.mxu0 0.0
    %120 = vmatpush1.msra.mxu0 0.0
    %121 = vmatprep.subr.mxu0 0.0
    %122 = vmatpush1.msra.mxu0 0.0
    %123 = vmatprep.subr.mxu0 0.0
    %124 = vmatpush1.msra.mxu0 0.0
    %125 = vmatprep.subr.mxu0 0.0
    %126 = vmatpush1.msra.mxu0 0.0
    %127 = vmatprep.mubr.f32.mxu0 0.0
    %128 = vmatmul.mubr.f32.gmra.mrb[0].mxu0 %v58
    %v129 = vpop.f32.mrb[0].mxu0
    %v130 = vadd.f32 %v54, %v129
    %v131 = vpop.f32.mrb[0].mxu0
    %132 = vmatprep.mubr.f32.mxu0 0.0
    %133 = vmatmul.mubr.f32.gmra.mrb[0].mxu0 %v61
    %v134 = vpop.f32.mrb[0].mxu0
    %v135 = vadd.f32 %v54, %v134
    %v136 = vpop.f32.mrb[0].mxu0
    %137 = vdwg.mxu0
    %vm138 = vcmask 785408
    %139 = vst.msk [vmem:[#allocation7] sm:$0xff] %vm138, %v130
    %140 = vst.msk [vmem:[#allocation7 + $0x8] sm:$0xff] %vm138, %v135
    // Predicated region
    $region22: #{tpu_custom_call.1} parent=1 // pred_check
      _
    $region23: #{tpu_custom_call.1} parent=1 // pred_check_branch
      %142 = sbr.rel (0) target = $region25
    $region24: #{tpu_custom_call.1} parent=1 // pred_region
      %s144 = ssub.s32 256, 256
      %145 = vsyncadd [#allocation4], %s144
      %s146 = sshll.u32 [#allocation7], 4
      %s147 = int_to_ptr.vmem [resolvable:$true] %s146
      %152 = dma.vmem_to_hbm [thread:$0]  %s147, 256, %s3, [#allocation4], 128, 128, 8
    $region25: #{tpu_custom_call.1} parent=1 // pred_fallthru
      _
    // Predicated region
    $region26: #{tpu_custom_call.1} parent=1 // pred_check
      _
    $region27: #{tpu_custom_call.1} parent=1 // pred_check_branch
      %154 = sbr.rel (0) target = $region29
    $region28: #{tpu_custom_call.1} parent=1 // pred_region
      %155 = dma.done [#allocation4], 256
    $region29: #{tpu_custom_call.1} parent=1 // pred_fallthru
      _
    %156 = vsyncpa [#allocation3], 1
    %157 = vsyncpa [#allocation6], 1
    %158 = vsyncpa [#allocation4], 1

</llo_original>
